<compile_context>
chip_gen: v6e
topology: v6e:2x2x1
jax: 0.10.0
libtpu: 0.0.40
codegen_flags: <defaults>
</compile_context>

<pallas_src>
import functools

import jax
import jax.numpy as jnp
from jax.experimental import pallas as pl
from jax.experimental.pallas import tpu as pltpu

_LANES = 128
_ROW_CHUNK = 512  # strip-mine rows per inner step (keeps k'_i small / in-regs)


def _round_up(a, b):
    return -(-a // b) * b


def _rknet_kernel(lbd_ref, alpha_ref, beta_ref, tx_ref, o_ref, *, m, h, chunk):
    """One (TR, 128) lane/sublane-dense tile of the explicit RK step.

    lbd_ref   : SMEM (m,)          f32
    alpha_ref : SMEM (m-1,)        f32
    beta_ref  : SMEM (m-1, m-1)    f32
    tx_ref    : VMEM (2, TR, 128)  f32   plane 0 = t, plane 1 = x_t
    o_ref     : VMEM (TR, 128)     f32
    """
    h_f = jnp.float32(h)
    # Hoist all scalar (SMEM) reads + fold h once; these live in sregs.
    lbd_h = [lbd_ref[i] * h_f for i in range(m)]
    alpha_h = [alpha_ref[i] * h_f for i in range(m - 1)]
    beta_h = [[beta_ref[i, j] * h_f for j in range(m - 1)] for i in range(m - 1)]

    tr = o_ref.shape[0]
    n_chunks = tr // chunk  # static

    # TrainedDeeponet(t, x) == t * x -> every stage is pure VPU elementwise.
    # Work with k'_i = t_temp * x_temp (so K_i = h * k'_i); h is folded into
    # the scalar coefficients, and the output is accumulated inside the stage
    # loop so only k'_0..k'_{m-1} and `out` are live per chunk.
    for c in range(n_chunks):
        r0 = c * chunk
        r1 = r0 + chunk
        t = tx_ref[0, r0:r1, :]
        xv = tx_ref[1, r0:r1, :]

        k0 = t * xv                                   # k'_0
        out = xv + lbd_h[0] * k0
        ks = [k0]
        for i in range(m - 1):
            t_i = t + alpha_h[i]
            x_i = xv
            for j in range(len(ks)):
                x_i = x_i + beta_h[i][j] * ks[j]
            k_new = t_i * x_i                         # k'_{i+1}
            out = out + lbd_h[i + 1] * k_new
            ks.append(k_new)

        o_ref[r0:r1, :] = out


@functools.partial(jax.jit, static_argnames=("m", "h", "block_rows"))
def rknet_forward(x, lbd, alpha, beta, *, m=4, h=0.01, block_rows=2048):
    """x: (B, >=2) float32 -> (B, 1) float32 (matches PyTorch RKnet.forward).

    Everything (column split, pad, reshape, output slice) is inside the jit so
    it fuses; the kernel sees lane/sublane-dense (rows, 128) f32 tiles.
    """
    B = x.shape[0]
    rows = max(1, -(-B // _LANES))                   # ceil(B / 128)

    tr = min(block_rows, _round_up(rows, 8))
    if rows > 8:
        # Ensure at least two grid tiles so both v7x TensorCores are engaged
        # (no-op on single-TC v5e/v6e).
        tr = min(tr, _round_up(-(-rows // 2), 8))
    tr = _round_up(tr, 8)
    rows_padded = _round_up(rows, tr)
    n_pad = rows_padded * _LANES - B

    # One fused transpose+pad copy under jit: (B, >=2) -> (2, rows_padded, 128)
    tx = jnp.stack([x[:, 0], x[:, 1]]).astype(jnp.float32)          # (2, B)
    tx = jnp.pad(tx, ((0, 0), (0, n_pad))).reshape(2, rows_padded, _LANES)

    chunk = _ROW_CHUNK if (tr > _ROW_CHUNK and tr % _ROW_CHUNK == 0) else tr

    # VMEM budget: 3 double-buffered plane tiles (t, x_t, out) + per-chunk
    # intermediates (k'_0..k'_{m-1}, out, t_temp, x_temp) with headroom.
    io_bytes = 3 * 2 * tr * _LANES * 4
    tmp_bytes = (m + 4) * chunk * _LANES * 4
    vmem_limit = int(min(48 << 20, max(32 << 20, 2 * (io_bytes + tmp_bytes))))

    grid = (rows_padded // tr,)

    out = pl.pallas_call(
        functools.partial(_rknet_kernel, m=m, h=h, chunk=chunk),
        out_shape=jax.ShapeDtypeStruct((rows_padded, _LANES), jnp.float32),
        grid=grid,
        in_specs=[
            pl.BlockSpec(memory_space=pltpu.MemorySpace.SMEM),        # lbd
            pl.BlockSpec(memory_space=pltpu.MemorySpace.SMEM),        # alpha
            pl.BlockSpec(memory_space=pltpu.MemorySpace.SMEM),        # Beta
            pl.BlockSpec((2, tr, _LANES), lambda i: (0, i, 0)),       # t/x slab
        ],
        out_specs=pl.BlockSpec((tr, _LANES), lambda i: (i, 0)),
        compiler_params=pltpu.CompilerParams(
            dimension_semantics=("parallel",),   # split tiles across TCs on v7x
            vmem_limit_bytes=vmem_limit,
        ),
    )(lbd.astype(jnp.float32), alpha.astype(jnp.float32),
      beta.astype(jnp.float32), tx)

    # Fused (under jit) repack to the module's (B, 1) output convention.
    return out.reshape(-1)[:B].reshape(B, 1)


def rknet_ref(x, lbd, alpha, beta, *, m=4, h=0.01):
    """Pure-JAX reference mirroring the PyTorch forward."""
    t = x[:, 0:1]
    xv = x[:, 1:2]
    k_list = [h * t * xv]
    for i in range(m - 1):
        t_temp = t + alpha[i] * h
        x_temp = xv + sum(beta[i, j] * k for j, k in enumerate(k_list))
        k_list.append(h * t_temp * x_temp)
    return xv + sum(lbd[i] * k for i, k in enumerate(k_list))


if __name__ == "__main__":
    m, h = 4, 0.01

    # Parameters initialized exactly as in RKnet.__init__ (all ones).
    lbd = jnp.ones((m,), dtype=jnp.float32)
    alpha = jnp.ones((m - 1,), dtype=jnp.float32)
    beta = jnp.ones((m - 1, m - 1), dtype=jnp.float32)

    # Small primary check (matches the module's (B, 2) input convention).
    x_small = jax.random.normal(jax.random.PRNGKey(0), (8, 2), dtype=jnp.float32)
    out_small = jax.block_until_ready(
        rknet_forward(x_small, lbd, alpha, beta, m=m, h=h))
    exp_small = rknet_ref(x_small, lbd, alpha, beta, m=m, h=h)
    assert out_small.shape == (8, 1), out_small.shape
    assert jnp.allclose(out_small, exp_small, rtol=1e-5, atol=1e-6)

    # Second check exercising the multi-tile grid + padding path.
    x_big = jax.random.normal(jax.random.PRNGKey(1), (2000, 2), dtype=jnp.float32)
    out_big = jax.block_until_ready(
        rknet_forward(x_big, lbd, alpha, beta, m=m, h=h, block_rows=8))
    exp_big = rknet_ref(x_big, lbd, alpha, beta, m=m, h=h)
    assert out_big.shape == (2000, 1), out_big.shape
    assert jnp.allclose(out_big, exp_big, rtol=1e-5, atol=1e-6)

    print("KERNEL_OK")
</pallas_src>

<mosaic_0001>
module attributes {stable_mosaic.version = 11 : i64} {
  func.func @_rknet_kernel(%arg0: i32, %arg1: memref<4xf32, #tpu.memory_space<smem>>, %arg2: memref<3xf32, #tpu.memory_space<smem>>, %arg3: memref<3x3xf32, #tpu.memory_space<smem>>, %arg4: memref<2x8x128xf32, #tpu.memory_space<vmem>>, %arg5: memref<8x128xf32, #tpu.memory_space<vmem>>) attributes {dimension_semantics = [#tpu.dimension_semantics<parallel>], iteration_bounds = array<i64: 1>, scalar_prefetch = 0 : i64, scratch_operands = 0 : i64, tpu.core_type = #tpu.core_type<tc>, window_params = [{transform_indices = @transform_0, window_bounds = array<i64: 4>}, {transform_indices = @transform_1, window_bounds = array<i64: 3>}, {transform_indices = @transform_2, window_bounds = array<i64: 3, 3>}, {transform_indices = @transform_3, window_bounds = array<i64: 2, 8, 128>}, {transform_indices = @transform_4, window_bounds = array<i64: 8, 128>}]} {
    %c0 = arith.constant 0 : index
    %0 = memref.load %arg1[%c0] : memref<4xf32, #tpu.memory_space<smem>>
    %cst = arith.constant 0.00999999977 : f32
    %1 = arith.mulf %0, %cst : f32
    %c1 = arith.constant 1 : index
    %2 = memref.load %arg1[%c1] : memref<4xf32, #tpu.memory_space<smem>>
    %cst_0 = arith.constant 0.00999999977 : f32
    %3 = arith.mulf %2, %cst_0 : f32
    %c2 = arith.constant 2 : index
    %4 = memref.load %arg1[%c2] : memref<4xf32, #tpu.memory_space<smem>>
    %cst_1 = arith.constant 0.00999999977 : f32
    %5 = arith.mulf %4, %cst_1 : f32
    %c3 = arith.constant 3 : index
    %6 = memref.load %arg1[%c3] : memref<4xf32, #tpu.memory_space<smem>>
    %cst_2 = arith.constant 0.00999999977 : f32
    %7 = arith.mulf %6, %cst_2 : f32
    %c0_3 = arith.constant 0 : index
    %8 = memref.load %arg2[%c0_3] : memref<3xf32, #tpu.memory_space<smem>>
    %cst_4 = arith.constant 0.00999999977 : f32
    %9 = arith.mulf %8, %cst_4 : f32
    %c1_5 = arith.constant 1 : index
    %10 = memref.load %arg2[%c1_5] : memref<3xf32, #tpu.memory_space<smem>>
    %cst_6 = arith.constant 0.00999999977 : f32
    %11 = arith.mulf %10, %cst_6 : f32
    %c2_7 = arith.constant 2 : index
    %12 = memref.load %arg2[%c2_7] : memref<3xf32, #tpu.memory_space<smem>>
    %cst_8 = arith.constant 0.00999999977 : f32
    %13 = arith.mulf %12, %cst_8 : f32
    %c0_9 = arith.constant 0 : index
    %c0_10 = arith.constant 0 : index
    %14 = memref.load %arg3[%c0_9, %c0_10] : memref<3x3xf32, #tpu.memory_space<smem>>
    %cst_11 = arith.constant 0.00999999977 : f32
    %15 = arith.mulf %14, %cst_11 : f32
    %c1_12 = arith.constant 1 : index
    %c0_13 = arith.constant 0 : index
    %16 = memref.load %arg3[%c1_12, %c0_13] : memref<3x3xf32, #tpu.memory_space<smem>>
    %cst_14 = arith.constant 0.00999999977 : f32
    %17 = arith.mulf %16, %cst_14 : f32
    %c1_15 = arith.constant 1 : index
    %c1_16 = arith.constant 1 : index
    %18 = memref.load %arg3[%c1_15, %c1_16] : memref<3x3xf32, #tpu.memory_space<smem>>
    %cst_17 = arith.constant 0.00999999977 : f32
    %19 = arith.mulf %18, %cst_17 : f32
    %c2_18 = arith.constant 2 : index
    %c0_19 = arith.constant 0 : index
    %20 = memref.load %arg3[%c2_18, %c0_19] : memref<3x3xf32, #tpu.memory_space<smem>>
    %cst_20 = arith.constant 0.00999999977 : f32
    %21 = arith.mulf %20, %cst_20 : f32
    %c2_21 = arith.constant 2 : index
    %c1_22 = arith.constant 1 : index
    %22 = memref.load %arg3[%c2_21, %c1_22] : memref<3x3xf32, #tpu.memory_space<smem>>
    %cst_23 = arith.constant 0.00999999977 : f32
    %23 = arith.mulf %22, %cst_23 : f32
    %c2_24 = arith.constant 2 : index
    %c2_25 = arith.constant 2 : index
    %24 = memref.load %arg3[%c2_24, %c2_25] : memref<3x3xf32, #tpu.memory_space<smem>>
    %cst_26 = arith.constant 0.00999999977 : f32
    %25 = arith.mulf %24, %cst_26 : f32
    %c0_27 = arith.constant 0 : index
    %c0_28 = arith.constant 0 : index
    %c0_29 = arith.constant 0 : index
    %26 = vector.load %arg4[%c0_27, %c0_28, %c0_29] : memref<2x8x128xf32, #tpu.memory_space<vmem>>, vector<1x8x128xf32>
    %27 = vector.shape_cast %26 : vector<1x8x128xf32> to vector<8x128xf32>
    %c1_30 = arith.constant 1 : index
    %c0_31 = arith.constant 0 : index
    %c0_32 = arith.constant 0 : index
    %28 = vector.load %arg4[%c1_30, %c0_31, %c0_32] : memref<2x8x128xf32, #tpu.memory_space<vmem>>, vector<1x8x128xf32>
    %29 = vector.shape_cast %28 : vector<1x8x128xf32> to vector<8x128xf32>
    %30 = arith.mulf %27, %29 : vector<8x128xf32>
    %31 = vector.broadcast %1 : f32 to vector<8x128xf32>
    %32 = arith.mulf %31, %30 : vector<8x128xf32>
    %33 = arith.addf %29, %32 : vector<8x128xf32>
    %34 = vector.broadcast %9 : f32 to vector<8x128xf32>
    %35 = arith.addf %27, %34 : vector<8x128xf32>
    %36 = vector.broadcast %15 : f32 to vector<8x128xf32>
    %37 = arith.mulf %36, %30 : vector<8x128xf32>
    %38 = arith.addf %29, %37 : vector<8x128xf32>
    %39 = arith.mulf %35, %38 : vector<8x128xf32>
    %40 = vector.broadcast %3 : f32 to vector<8x128xf32>
    %41 = arith.mulf %40, %39 : vector<8x128xf32>
    %42 = arith.addf %33, %41 : vector<8x128xf32>
    %43 = vector.broadcast %11 : f32 to vector<8x128xf32>
    %44 = arith.addf %27, %43 : vector<8x128xf32>
    %45 = vector.broadcast %17 : f32 to vector<8x128xf32>
    %46 = arith.mulf %45, %30 : vector<8x128xf32>
    %47 = arith.addf %29, %46 : vector<8x128xf32>
    %48 = vector.broadcast %19 : f32 to vector<8x128xf32>
    %49 = arith.mulf %48, %39 : vector<8x128xf32>
    %50 = arith.addf %47, %49 : vector<8x128xf32>
    %51 = arith.mulf %44, %50 : vector<8x128xf32>
    %52 = vector.broadcast %5 : f32 to vector<8x128xf32>
    %53 = arith.mulf %52, %51 : vector<8x128xf32>
    %54 = arith.addf %42, %53 : vector<8x128xf32>
    %55 = vector.broadcast %13 : f32 to vector<8x128xf32>
    %56 = arith.addf %27, %55 : vector<8x128xf32>
    %57 = vector.broadcast %21 : f32 to vector<8x128xf32>
    %58 = arith.mulf %57, %30 : vector<8x128xf32>
    %59 = arith.addf %29, %58 : vector<8x128xf32>
    %60 = vector.broadcast %23 : f32 to vector<8x128xf32>
    %61 = arith.mulf %60, %39 : vector<8x128xf32>
    %62 = arith.addf %59, %61 : vector<8x128xf32>
    %63 = vector.broadcast %25 : f32 to vector<8x128xf32>
    %64 = arith.mulf %63, %51 : vector<8x128xf32>
    %65 = arith.addf %62, %64 : vector<8x128xf32>
    %66 = arith.mulf %56, %65 : vector<8x128xf32>
    %67 = vector.broadcast %7 : f32 to vector<8x128xf32>
    %68 = arith.mulf %67, %66 : vector<8x128xf32>
    %69 = arith.addf %54, %68 : vector<8x128xf32>
    %c0_33 = arith.constant 0 : index
    %c0_34 = arith.constant 0 : index
    %70 = vector.load %arg5[%c0_33, %c0_34] : memref<8x128xf32, #tpu.memory_space<vmem>>, vector<8x128xf32>
    tpu.vector_store %arg5[%c0_33, %c0_34], %69 {strides = array<i32>} : memref<8x128xf32, #tpu.memory_space<vmem>>, vector<8x128xf32>,
    return
  }
  func.func @transform_0(%arg0: i32) -> i32 {
    %c0_i32 = arith.constant 0 : i32
    %c0_i32_0 = arith.constant 0 : i32
    return %c0_i32 : i32
  }
  func.func @transform_1(%arg0: i32) -> i32 {
    %c0_i32 = arith.constant 0 : i32
    %c0_i32_0 = arith.constant 0 : i32
    return %c0_i32 : i32
  }
  func.func @transform_2(%arg0: i32) -> (i32, i32) {
    %c0_i32 = arith.constant 0 : i32
    %c0_i32_0 = arith.constant 0 : i32
    %c0_i32_1 = arith.constant 0 : i32
    return %c0_i32, %c0_i32_0 : i32, i32
  }
  func.func @transform_3(%arg0: i32) -> (i32, i32, i32) {
    %c0_i32 = arith.constant 0 : i32
    %c0_i32_0 = arith.constant 0 : i32
    %c0_i32_1 = arith.constant 0 : i32
    return %c0_i32, %arg0, %c0_i32_0 : i32, i32, i32
  }
  func.func @transform_4(%arg0: i32) -> (i32, i32) {
    %c0_i32 = arith.constant 0 : i32
    %c0_i32_0 = arith.constant 0 : i32
    return %arg0, %c0_i32 : i32, i32
  }
}

</mosaic_0001>

<llo_original>
// kernel: rknet_forward.1
$region0: #{rknet_forward.1}
  #allocation0 [shape = 'u32[]', space=smem, size = 0x4, offset = 0x4, fixed_abs, tag = 'smem constant byte address 0x4 - core index']
  #allocation1 [shape = 'u32[144,128]{1,0:T(1,128)}', space=vmem, size = 0x12000, scoped, tag = 'internal scratch']
  %s0 = inlined_call_operand.vmem [shape: f32[4], index: 0, kind: input, shape index: {}]
  %s1 = inlined_call_operand.vmem [shape: f32[3], index: 1, kind: input, shape index: {}]
  %s2 = inlined_call_operand.vmem [shape: f32[3,3], index: 2, kind: input, shape index: {}]
  %s3 = inlined_call_operand.vmem [shape: f32[2,8,128], index: 3, kind: input, shape index: {}]
  %s4 = inlined_call_operand.vmem [shape: f32[8,128], index: 4, kind: output, shape index: {}]
  %s5 = sld [smem:[#allocation0]]
  $region38: #{rknet_forward.1} parent=0
    _
  %s7 = ssub.s32 1, %s5
  %s8 = scalar_select 0, %s7, %s5
  $region1: #{rknet_forward.1} parent=0
    #allocation2 [shape = 'u8[512]{0}', space=smem, size = 0x200, scoped, tag = 'input window, operand 0, single buffered']
    #allocation3 [shape = 's32[1]{0}', space=sflag, size = 0x4, scoped, tag = 'scoped memory for rknet_forward.1']
    #allocation4 [shape = 'u8[512]{0}', space=smem, size = 0x200, scoped, tag = 'input window, operand 1, single buffered']
    #allocation5 [shape = 's32[1]{0}', space=sflag, size = 0x4, scoped, tag = 'scoped memory for rknet_forward.1']
    #allocation6 [shape = 'u8[2048]{0}', space=smem, size = 0x800, scoped, tag = 'input window, operand 2, single buffered']
    %9 = vsyncpa [#allocation3], 0
    %10 = vsyncpa [#allocation5], 0
    // Predicated region
    $region2: #{rknet_forward.1} parent=1 // pred_check
      _
    $region3: #{rknet_forward.1} parent=1 // pred_check_branch
      %12 = sbr.rel (0) target = $region5
    $region4: #{rknet_forward.1} parent=1 // pred_region
      %s14 = ssub.s32 16, 16
      %15 = vsyncadd [#allocation3], %s14
      %s17 = sshll.u32 %s0, 4
      %s18 = int_to_ptr.vmem [resolvable:$true] %s17
      %20 = dma.vmem_to_smem %s18, 16, [#allocation2], [#allocation3]
    $region5: #{rknet_forward.1} parent=1 // pred_fallthru
      _
    // Predicated region
    $region6: #{rknet_forward.1} parent=1 // pred_check
      _
    $region7: #{rknet_forward.1} parent=1 // pred_check_branch
      %22 = sbr.rel (0) target = $region9
    $region8: #{rknet_forward.1} parent=1 // pred_region
      %s24 = ssub.s32 16, 16
      %25 = vsyncadd [#allocation5], %s24
      %s27 = sshll.u32 %s1, 4
      %s28 = int_to_ptr.vmem [resolvable:$true] %s27
      %30 = dma.vmem_to_smem %s28, 16, [#allocation4], [#allocation5]
    $region9: #{rknet_forward.1} parent=1 // pred_fallthru
      _
    // Predicated region
    $region10: #{rknet_forward.1} parent=1 // pred_check
      _
    $region11: #{rknet_forward.1} parent=1 // pred_check_branch
      %32 = sbr.rel (0) target = $region13
    $region12: #{rknet_forward.1} parent=1 // pred_region
      %s34 = ssub.s32 64, 64
      %35 = vsyncadd [#allocation5], %s34
      %s37 = sshll.u32 %s2, 4
      %s38 = int_to_ptr.vmem [resolvable:$true] %s37
      %40 = dma.vmem_to_smem %s38, 64, [#allocation6], [#allocation5]
    $region13: #{rknet_forward.1} parent=1 // pred_fallthru
      _
    // Predicated region
    $region14: #{rknet_forward.1} parent=1 // pred_check
      _
    $region15: #{rknet_forward.1} parent=1 // pred_check_branch
      %42 = sbr.rel (0) target = $region17
    $region16: #{rknet_forward.1} parent=1 // pred_region
      _
    $region17: #{rknet_forward.1} parent=1 // pred_fallthru
      _
    // Predicated region
    $region18: #{rknet_forward.1} parent=1 // pred_check
      _
    $region19: #{rknet_forward.1} parent=1 // pred_check_branch
      %44 = sbr.rel (0) target = $region21
    $region20: #{rknet_forward.1} parent=1 // pred_region
      %45 = dma.done [#allocation3], 16
    $region21: #{rknet_forward.1} parent=1 // pred_fallthru
      _
    // Predicated region
    $region22: #{rknet_forward.1} parent=1 // pred_check
      _
    $region23: #{rknet_forward.1} parent=1 // pred_check_branch
      %47 = sbr.rel (0) target = $region25
    $region24: #{rknet_forward.1} parent=1 // pred_region
      %48 = dma.done [#allocation5], 16
    $region25: #{rknet_forward.1} parent=1 // pred_fallthru
      _
    // Predicated region
    $region26: #{rknet_forward.1} parent=1 // pred_check
      _
    $region27: #{rknet_forward.1} parent=1 // pred_check_branch
      %50 = sbr.rel (0) target = $region29
    $region28: #{rknet_forward.1} parent=1 // pred_region
      %51 = dma.done [#allocation5], 64
    $region29: #{rknet_forward.1} parent=1 // pred_fallthru
      _
    %52 = sfence
    %s53 = sld [smem:[#allocation2]]
    %s54 = smul.f32 %s53, 0.01
    %s55 = sld [smem:[#allocation2 + $0x1]]
    %s56 = smul.f32 %s55, 0.01
    %s57 = sld [smem:[#allocation2 + $0x2]]
    %s58 = smul.f32 %s57, 0.01
    %s59 = sld [smem:[#allocation2 + $0x3]]
    %s60 = smul.f32 %s59, 0.01
    %s61 = sld [smem:[#allocation4]]
    %s62 = smul.f32 %s61, 0.01
    %s63 = sld [smem:[#allocation4 + $0x1]]
    %s64 = smul.f32 %s63, 0.01
    %s65 = sld [smem:[#allocation4 + $0x2]]
    %s66 = smul.f32 %s65, 0.01
    %s67 = sld [smem:[#allocation6]]
    %s68 = smul.f32 %s67, 0.01
    %s69 = sld [smem:[#allocation6 + $0x80]]
    %s70 = smul.f32 %s69, 0.01
    %s71 = sld [smem:[#allocation6 + $0x81]]
    %s72 = smul.f32 %s71, 0.01
    %s73 = sld [smem:[#allocation6 + $0x100]]
    %s74 = smul.f32 %s73, 0.01
    %s75 = sld [smem:[#allocation6 + $0x101]]
    %s76 = smul.f32 %s75, 0.01
    %s77 = sld [smem:[#allocation6 + $0x102]]
    %s78 = smul.f32 %s77, 0.01
    %v79 = vld [vmem:[%s3] sm:$0xff]
    %s80 = scalar_lea.vmem %s3, 8
    %v81 = vld [vmem:[%s80] sm:$0xff]
    %v82 = vmul.f32 %v79, %v81
    %v83 = vstv %s54
    %v84 = vmul.f32 %v83, %v82
    %v85 = vadd.f32 %v81, %v84
    %v86 = vstv %s62
    %v87 = vadd.f32 %v79, %v86
    %v88 = vstv %s68
    %v89 = vmul.f32 %v88, %v82
    %v90 = vadd.f32 %v81, %v89
    %v91 = vmul.f32 %v87, %v90
    %v92 = vstv %s56
    %v93 = vmul.f32 %v92, %v91
    %v94 = vadd.f32 %v85, %v93
    %v95 = vstv %s64
    %v96 = vadd.f32 %v79, %v95
    %v97 = vstv %s70
    %v98 = vmul.f32 %v97, %v82
    %v99 = vadd.f32 %v81, %v98
    %v100 = vstv %s72
    %v101 = vmul.f32 %v100, %v91
    %v102 = vadd.f32 %v99, %v101
    %v103 = vmul.f32 %v96, %v102
    %v104 = vstv %s58
    %v105 = vmul.f32 %v104, %v103
    %v106 = vadd.f32 %v94, %v105
    %v107 = vstv %s66
    %v108 = vadd.f32 %v79, %v107
    %v109 = vstv %s74
    %v110 = vmul.f32 %v109, %v82
    %v111 = vadd.f32 %v81, %v110
    %v112 = vstv %s76
    %v113 = vmul.f32 %v112, %v91
    %v114 = vadd.f32 %v111, %v113
    %v115 = vstv %s78
    %v116 = vmul.f32 %v115, %v103
    %v117 = vadd.f32 %v114, %v116
    %v118 = vmul.f32 %v108, %v117
    %v119 = vstv %s60
    %v120 = vmul.f32 %v119, %v118
    %v121 = vadd.f32 %v106, %v120
    %122 = vst [vmem:[%s4] sm:$0xff] %v121
    // Predicated region
    $region30: #{rknet_forward.1} parent=1 // pred_check
      _
    $region31: #{rknet_forward.1} parent=1 // pred_check_branch
      %124 = sbr.rel (0) target = $region33
    $region32: #{rknet_forward.1} parent=1 // pred_region
      _
    $region33: #{rknet_forward.1} parent=1 // pred_fallthru
      _
    // Predicated region
    $region34: #{rknet_forward.1} parent=1 // pred_check
      _
    $region35: #{rknet_forward.1} parent=1 // pred_check_branch
      %126 = sbr.rel (0) target = $region37
    $region36: #{rknet_forward.1} parent=1 // pred_region
      _
    $region37: #{rknet_forward.1} parent=1 // pred_fallthru
      _
    %127 = vsyncpa [#allocation3], 1
    %128 = vsyncpa [#allocation5], 1

</llo_original>
